<compile_context>
chip_gen: v7x
topology: tpu7x:2x2x1
jax: 0.10.0
libtpu: 0.0.40
codegen_flags: <defaults>
</compile_context>

<pallas_src>
import jax
import jax.numpy as jnp
from jax.experimental import pallas as pl
from jax.experimental.pallas import tpu as pltpu


def _round_up(x, m):
    return ((x + m - 1) // m) * m


def lcf_cls_head_kernel(g_ref, l_ref, lcf_ref,
                        wl_ref, wg_ref, bf_ref,
                        wd_ref, bd_ref,
                        out_ref):
    """CLS-row LCF fusion + linear + dense polarity head, one row tile per step.

    g_ref   : (TB, Hp)  bf16  global CLS features
    l_ref   : (TB, Hp)  bf16  local CLS features
    lcf_ref : (TB, Hp)  bf16  LCF weighting vector (CLS row)
    wl_ref  : (Hp, Hp)  bf16  fusion weight, LCF (local) half of the concat
    wg_ref  : (Hp, Hp)  bf16  fusion weight, global half of the concat
    bf_ref  : (1, Hp)   f32   fusion bias
    wd_ref  : (Hp, Cp)  bf16  dense (polarity) weight
    bd_ref  : (1, Cp)   f32   dense bias
    out_ref : (TB, Cp)  f32   polarity logits (lane-dense, Cp = 128-padded)
    """
    # LCF weighting: elementwise multiply (VPU), bf16 operands.
    lcf_feat = l_ref[...] * lcf_ref[...]                              # (TB, Hp)

    # Linear over the concat [lcf_feat ; global_feat]:
    #   cat @ W_fuse == lcf_feat @ W_l + global_feat @ W_g            (MXU, f32 acc)
    fused = (jnp.dot(lcf_feat, wl_ref[...], preferred_element_type=jnp.float32)
             + jnp.dot(g_ref[...], wg_ref[...], preferred_element_type=jnp.float32)
             + bf_ref[...])                                           # (TB, Hp) f32

    # Dropout: eval mode -> identity.  CLS pooling is already hoisted (inputs
    # are token-0 rows only), so `fused` IS the pooled representation.
    pooled = fused.astype(jnp.bfloat16)

    # Polarity head (MXU, f32 acc) -> lane-dense store.
    out_ref[...] = (jnp.dot(pooled, wd_ref[...],
                            preferred_element_type=jnp.float32)
                    + bd_ref[...])                                    # (TB, Cp)


def lcf_template_forward(global_feat, local_feat, lcf_vec,
                         w_local, w_global, b_fuse, w_dense, b_dense):
    """LCF fusion + CLS pooling + polarity head.  Returns (B, C) f32 logits."""
    B, S, H = global_feat.shape
    C = w_dense.shape[-1]

    LANE, SUB = 128, 8
    Hp = _round_up(H, LANE)
    Cp = _round_up(C, LANE)
    TB = 128 if B >= 128 else _round_up(B, SUB)      # sublane-aligned row tile
    Bp = _round_up(B, TB)

    # ---- hoist CLS pooling: only the token-0 rows reach the kernel ----------
    g_cls = global_feat[:, 0, :]                     # (B, H)
    l_cls = local_feat[:, 0, :]
    v_cls = lcf_vec[:, 0, :]

    def pad2(x, rows, cols, dtype):
        r, c = x.shape
        return jnp.pad(x, ((0, rows - r), (0, cols - c))).astype(dtype)

    g_p = pad2(g_cls, Bp, Hp, jnp.bfloat16)
    l_p = pad2(l_cls, Bp, Hp, jnp.bfloat16)
    v_p = pad2(v_cls, Bp, Hp, jnp.bfloat16)
    wl_p = pad2(w_local, Hp, Hp, jnp.bfloat16)
    wg_p = pad2(w_global, Hp, Hp, jnp.bfloat16)
    bf_p = pad2(b_fuse, 1, Hp, jnp.float32)
    wd_p = pad2(w_dense, Hp, Cp, jnp.bfloat16)
    bd_p = pad2(b_dense, 1, Cp, jnp.float32)

    row_spec = pl.BlockSpec((TB, Hp), lambda i: (i, 0))
    grid_spec = pltpu.PrefetchScalarGridSpec(
        num_scalar_prefetch=0,
        grid=(Bp // TB,),
        in_specs=[
            row_spec,                                  # global CLS rows
            row_spec,                                  # local CLS rows
            row_spec,                                  # lcf CLS rows
            pl.BlockSpec((Hp, Hp), lambda i: (0, 0)),  # w_local  (VMEM resident)
            pl.BlockSpec((Hp, Hp), lambda i: (0, 0)),  # w_global (VMEM resident)
            pl.BlockSpec((1, Hp), lambda i: (0, 0)),   # b_fuse
            pl.BlockSpec((Hp, Cp), lambda i: (0, 0)),  # w_dense  (VMEM resident)
            pl.BlockSpec((1, Cp), lambda i: (0, 0)),   # b_dense
        ],
        out_specs=pl.BlockSpec((TB, Cp), lambda i: (i, 0)),
    )

    out_padded = pl.pallas_call(
        lcf_cls_head_kernel,
        out_shape=jax.ShapeDtypeStruct((Bp, Cp), jnp.float32),
        grid_spec=grid_spec,
        compiler_params=pltpu.CompilerParams(
            dimension_semantics=("parallel",),         # v7x: tiles split over 2 TCs
        ),
    )(g_p, l_p, v_p, wl_p, wg_p, bf_p, wd_p, bd_p)

    return out_padded[:B, :C]


if __name__ == "__main__":
    # Small, BERT-like shapes.
    B, S, H, C = 2, 8, 32, 3       # batch, seq, hidden, num_polarities
    VOCAB = 64

    key = jax.random.PRNGKey(0)
    k_emb, k_ti, k_tr, k_lcf, k_wl, k_wg, k_bf, k_wd, k_bd = jax.random.split(key, 9)

    # Module inputs: ['text_indices', 'text_raw_bert_indices', 'lcf_vec']
    text_indices = jax.random.randint(k_ti, (B, S), 0, VOCAB)
    text_raw_bert_indices = jax.random.randint(k_tr, (B, S), 0, VOCAB)
    lcf_vec = jax.random.uniform(k_lcf, (B, S, H), dtype=jnp.float32)

    # Deterministic stand-in for the shared BERT encoder (bert4global == bert4local):
    # a simple embedding lookup producing (B, S, H) features.  (Glue, plain JAX.)
    embedding = 0.02 * jax.random.normal(k_emb, (VOCAB, H), dtype=jnp.float32)
    global_feat = embedding[text_indices]            # (B, S, H)
    local_feat = embedding[text_raw_bert_indices]    # (B, S, H)  same weights (shared BERT)

    # Deterministic head parameters (shapes implied by hidden dim / polarities).
    w_local = 0.05 * jax.random.normal(k_wl, (H, H), dtype=jnp.float32)
    w_global = 0.05 * jax.random.normal(k_wg, (H, H), dtype=jnp.float32)
    b_fuse = 0.01 * jax.random.normal(k_bf, (1, H), dtype=jnp.float32)
    w_dense = 0.05 * jax.random.normal(k_wd, (H, C), dtype=jnp.float32)
    b_dense = 0.01 * jax.random.normal(k_bd, (1, C), dtype=jnp.float32)

    logits = lcf_template_forward(global_feat, local_feat, lcf_vec,
                                  w_local, w_global, b_fuse, w_dense, b_dense)
    jax.block_until_ready(logits)

    # Reference check in plain JAX (full-precision module math).
    lcf_feat = local_feat * lcf_vec
    fused = (lcf_feat.reshape(B * S, H) @ w_local
             + global_feat.reshape(B * S, H) @ w_global + b_fuse).reshape(B, S, H)
    ref = fused[:, 0, :] @ w_dense + b_dense

    assert logits.shape == (B, C)
    # Tolerance accounts for the bf16 MXU operands (f32 accumulation).
    assert jnp.allclose(logits, ref, atol=1e-3, rtol=1e-2)

    print("KERNEL_OK")
</pallas_src>

<mosaic_0001>
module attributes {stable_mosaic.version = 11 : i64} {
  func.func @lcf_cls_head_kernel(%arg0: i32, %arg1: memref<8x128xbf16, #tpu.memory_space<vmem>>, %arg2: memref<8x128xbf16, #tpu.memory_space<vmem>>, %arg3: memref<8x128xbf16, #tpu.memory_space<vmem>>, %arg4: memref<128x128xbf16, #tpu.memory_space<vmem>>, %arg5: memref<128x128xbf16, #tpu.memory_space<vmem>>, %arg6: memref<1x128xf32, #tpu.memory_space<vmem>>, %arg7: memref<128x128xbf16, #tpu.memory_space<vmem>>, %arg8: memref<1x128xf32, #tpu.memory_space<vmem>>, %arg9: memref<8x128xf32, #tpu.memory_space<vmem>>) attributes {dimension_semantics = [#tpu.dimension_semantics<parallel>], iteration_bounds = array<i64: 1>, scalar_prefetch = 0 : i64, scratch_operands = 0 : i64, tpu.core_type = #tpu.core_type<tc>, window_params = [{transform_indices = @transform_0, window_bounds = array<i64: 8, 128>}, {transform_indices = @transform_1, window_bounds = array<i64: 8, 128>}, {transform_indices = @transform_2, window_bounds = array<i64: 8, 128>}, {pipeline_mode = #tpu.pipeline_mode<synchronous>, transform_indices = @transform_3, window_bounds = array<i64: 128, 128>}, {pipeline_mode = #tpu.pipeline_mode<synchronous>, transform_indices = @transform_4, window_bounds = array<i64: 128, 128>}, {pipeline_mode = #tpu.pipeline_mode<synchronous>, transform_indices = @transform_5, window_bounds = array<i64: 1, 128>}, {pipeline_mode = #tpu.pipeline_mode<synchronous>, transform_indices = @transform_6, window_bounds = array<i64: 128, 128>}, {pipeline_mode = #tpu.pipeline_mode<synchronous>, transform_indices = @transform_7, window_bounds = array<i64: 1, 128>}, {transform_indices = @transform_8, window_bounds = array<i64: 8, 128>}]} {
    %c0 = arith.constant 0 : index
    %c0_0 = arith.constant 0 : index
    %0 = vector.load %arg2[%c0, %c0_0] : memref<8x128xbf16, #tpu.memory_space<vmem>>, vector<8x128xbf16>
    %c0_1 = arith.constant 0 : index
    %c0_2 = arith.constant 0 : index
    %1 = vector.load %arg3[%c0_1, %c0_2] : memref<8x128xbf16, #tpu.memory_space<vmem>>, vector<8x128xbf16>
    %2 = arith.mulf %0, %1 : vector<8x128xbf16>
    %c0_3 = arith.constant 0 : index
    %c0_4 = arith.constant 0 : index
    %3 = vector.load %arg4[%c0_3, %c0_4] : memref<128x128xbf16, #tpu.memory_space<vmem>>, vector<128x128xbf16>
    %cst = arith.constant dense<0.000000e+00> : vector<8x128xf32>
    %4 = tpu.matmul %2, %3, %cst {dimension_numbers = #tpu.dot_dimension_numbers<[1], [0], [0], [1], [0, 0, 1, 1], [], []>} : vector<8x128xbf16>, vector<128x128xbf16>, vector<8x128xf32> -> vector<8x128xf32>
    %c0_5 = arith.constant 0 : index
    %c0_6 = arith.constant 0 : index
    %5 = vector.load %arg1[%c0_5, %c0_6] : memref<8x128xbf16, #tpu.memory_space<vmem>>, vector<8x128xbf16>
    %c0_7 = arith.constant 0 : index
    %c0_8 = arith.constant 0 : index
    %6 = vector.load %arg5[%c0_7, %c0_8] : memref<128x128xbf16, #tpu.memory_space<vmem>>, vector<128x128xbf16>
    %cst_9 = arith.constant dense<0.000000e+00> : vector<8x128xf32>
    %7 = tpu.matmul %5, %6, %cst_9 {dimension_numbers = #tpu.dot_dimension_numbers<[1], [0], [0], [1], [0, 0, 1, 1], [], []>} : vector<8x128xbf16>, vector<128x128xbf16>, vector<8x128xf32> -> vector<8x128xf32>
    %8 = arith.addf %4, %7 : vector<8x128xf32>
    %c0_10 = arith.constant 0 : index
    %c0_11 = arith.constant 0 : index
    %9 = vector.load %arg6[%c0_10, %c0_11] : memref<1x128xf32, #tpu.memory_space<vmem>>, vector<1x128xf32>
    %10 = vector.broadcast %9 : vector<1x128xf32> to vector<8x128xf32>
    %11 = arith.addf %8, %10 : vector<8x128xf32>
    %12 = arith.truncf %11 : vector<8x128xf32> to vector<8x128xbf16>
    %c0_12 = arith.constant 0 : index
    %c0_13 = arith.constant 0 : index
    %13 = vector.load %arg7[%c0_12, %c0_13] : memref<128x128xbf16, #tpu.memory_space<vmem>>, vector<128x128xbf16>
    %cst_14 = arith.constant dense<0.000000e+00> : vector<8x128xf32>
    %14 = tpu.matmul %12, %13, %cst_14 {dimension_numbers = #tpu.dot_dimension_numbers<[1], [0], [0], [1], [0, 0, 1, 1], [], []>} : vector<8x128xbf16>, vector<128x128xbf16>, vector<8x128xf32> -> vector<8x128xf32>
    %c0_15 = arith.constant 0 : index
    %c0_16 = arith.constant 0 : index
    %15 = vector.load %arg8[%c0_15, %c0_16] : memref<1x128xf32, #tpu.memory_space<vmem>>, vector<1x128xf32>
    %16 = vector.broadcast %15 : vector<1x128xf32> to vector<8x128xf32>
    %17 = arith.addf %14, %16 : vector<8x128xf32>
    %c0_17 = arith.constant 0 : index
    %c0_18 = arith.constant 0 : index
    %18 = vector.load %arg9[%c0_17, %c0_18] : memref<8x128xf32, #tpu.memory_space<vmem>>, vector<8x128xf32>
    tpu.vector_store %arg9[%c0_17, %c0_18], %17 {strides = array<i32>} : memref<8x128xf32, #tpu.memory_space<vmem>>, vector<8x128xf32>,
    return
  }
  func.func @transform_0(%arg0: i32) -> (i32, i32) {
    %c0_i32 = arith.constant 0 : i32
    %c0_i32_0 = arith.constant 0 : i32
    return %arg0, %c0_i32 : i32, i32
  }
  func.func @transform_1(%arg0: i32) -> (i32, i32) {
    %c0_i32 = arith.constant 0 : i32
    %c0_i32_0 = arith.constant 0 : i32
    return %arg0, %c0_i32 : i32, i32
  }
  func.func @transform_2(%arg0: i32) -> (i32, i32) {
    %c0_i32 = arith.constant 0 : i32
    %c0_i32_0 = arith.constant 0 : i32
    return %arg0, %c0_i32 : i32, i32
  }
  func.func @transform_3(%arg0: i32) -> (i32, i32) {
    %c0_i32 = arith.constant 0 : i32
    %c0_i32_0 = arith.constant 0 : i32
    %c0_i32_1 = arith.constant 0 : i32
    return %c0_i32, %c0_i32_0 : i32, i32
  }
  func.func @transform_4(%arg0: i32) -> (i32, i32) {
    %c0_i32 = arith.constant 0 : i32
    %c0_i32_0 = arith.constant 0 : i32
    %c0_i32_1 = arith.constant 0 : i32
    return %c0_i32, %c0_i32_0 : i32, i32
  }
  func.func @transform_5(%arg0: i32) -> (i32, i32) {
    %c0_i32 = arith.constant 0 : i32
    %c0_i32_0 = arith.constant 0 : i32
    %c0_i32_1 = arith.constant 0 : i32
    return %c0_i32, %c0_i32_0 : i32, i32
  }
  func.func @transform_6(%arg0: i32) -> (i32, i32) {
    %c0_i32 = arith.constant 0 : i32
    %c0_i32_0 = arith.constant 0 : i32
    %c0_i32_1 = arith.constant 0 : i32
    return %c0_i32, %c0_i32_0 : i32, i32
  }
  func.func @transform_7(%arg0: i32) -> (i32, i32) {
    %c0_i32 = arith.constant 0 : i32
    %c0_i32_0 = arith.constant 0 : i32
    %c0_i32_1 = arith.constant 0 : i32
    return %c0_i32, %c0_i32_0 : i32, i32
  }
  func.func @transform_8(%arg0: i32) -> (i32, i32) {
    %c0_i32 = arith.constant 0 : i32
    %c0_i32_0 = arith.constant 0 : i32
    return %arg0, %c0_i32 : i32, i32
  }
}

</mosaic_0001>

<llo_original>
// kernel: tpu_custom_call.1
$region0: #{tpu_custom_call.1}
  #allocation0 [shape = 'u32[]', space=smem, size = 0x4, offset = 0x4, fixed_abs, tag = 'smem constant byte address 0x4 - core index']
  #allocation1 [shape = 'u32[144,128]{1,0:T(1,128)}', space=vmem, size = 0x12000, scoped, tag = 'internal scratch']
  %s0 = inlined_call_operand.hbm [shape: bf16[8,128], index: 0, kind: input, shape index: {}]
  %s1 = inlined_call_operand.hbm [shape: bf16[8,128], index: 1, kind: input, shape index: {}]
  %s2 = inlined_call_operand.vmem [shape: bf16[8,128], index: 2, kind: input, shape index: {}]
  %s3 = inlined_call_operand.hbm [shape: bf16[128,128], index: 3, kind: input, shape index: {}]
  %s4 = inlined_call_operand.hbm [shape: bf16[128,128], index: 4, kind: input, shape index: {}]
  %s5 = inlined_call_operand.vmem [shape: f32[1,128], index: 5, kind: input, shape index: {}]
  %s6 = inlined_call_operand.hbm [shape: bf16[128,128], index: 6, kind: input, shape index: {}]
  %s7 = inlined_call_operand.vmem [shape: f32[1,128], index: 7, kind: input, shape index: {}]
  %s8 = inlined_call_operand.hbm [shape: f32[8,128], index: 8, kind: output, shape index: {}]
  %s9 = sld [smem:[#allocation0]]
  $region62: #{tpu_custom_call.1} parent=0
    _
  %s11 = ssub.s32 1, %s9
  %s12 = scalar_select 0, %s11, %s9
  $region1: #{tpu_custom_call.1} parent=0
    #allocation2 [shape = 'u8[2048]{0}', space=vmem, size = 0x800, scoped, tag = 'input window, operand 0, single buffered']
    #allocation3 [shape = 's32[1]{0}', space=sflag, size = 0x4, scoped, tag = 'scoped memory for tpu_custom_call.1']
    #allocation4 [shape = 's32[1]{0}', space=sflag, size = 0x4, scoped, tag = 'scoped memory for tpu_custom_call.1']
    #allocation5 [shape = 'u8[2048]{0}', space=vmem, size = 0x800, scoped, tag = 'input window, operand 1, single buffered']
    #allocation6 [shape = 's32[1]{0}', space=sflag, size = 0x4, scoped, tag = 'scoped memory for tpu_custom_call.1']
    #allocation7 [shape = 'u8[32768]{0}', space=vmem, size = 0x8000, scoped, tag = 'input window, operand 3, single buffered']
    #allocation8 [shape = 'u8[32768]{0}', space=vmem, size = 0x8000, scoped, tag = 'input window, operand 4, single buffered']
    #allocation9 [shape = 's32[1]{0}', space=sflag, size = 0x4, scoped, tag = 'scoped memory for tpu_custom_call.1']
    #allocation10 [shape = 'u8[32768]{0}', space=vmem, size = 0x8000, scoped, tag = 'input window, operand 6, single buffered']
    #allocation11 [shape = 'u8[4096]{0}', space=vmem, size = 0x1000, scoped, tag = 'output window, operand 0, single buffered']
    %13 = vsyncpa [#allocation3], 0
    %14 = vsyncpa [#allocation6], 0
    %15 = vsyncpa [#allocation9], 0
    %16 = vsyncpa [#allocation4], 0
    // Predicated region
    $region2: #{tpu_custom_call.1} parent=1 // pred_check
      _
    $region3: #{tpu_custom_call.1} parent=1 // pred_check_branch
      %18 = sbr.rel (0) target = $region5
    $region4: #{tpu_custom_call.1} parent=1 // pred_region
      %s20 = ssub.s32 64, 64
      %21 = vsyncadd [#allocation3], %s20
      %s23 = sshll.u32 [#allocation2], 4
      %s24 = int_to_ptr.vmem [resolvable:$true] %s23
      %26 = dma.hbm_to_vmem [thread:$0]  %s0, 64, %s24, [#allocation3]
    $region5: #{tpu_custom_call.1} parent=1 // pred_fallthru
      _
    // Predicated region
    $region6: #{tpu_custom_call.1} parent=1 // pred_check
      _
    $region7: #{tpu_custom_call.1} parent=1 // pred_check_branch
      %28 = sbr.rel (0) target = $region9
    $region8: #{tpu_custom_call.1} parent=1 // pred_region
      %s30 = ssub.s32 64, 64
      %31 = vsyncadd [#allocation6], %s30
      %s33 = sshll.u32 [#allocation5], 4
      %s34 = int_to_ptr.vmem [resolvable:$true] %s33
      %36 = dma.hbm_to_vmem [thread:$0]  %s1, 64, %s34, [#allocation6]
    $region9: #{tpu_custom_call.1} parent=1 // pred_fallthru
      _
    // Predicated region
    $region10: #{tpu_custom_call.1} parent=1 // pred_check
      _
    $region11: #{tpu_custom_call.1} parent=1 // pred_check_branch
      %38 = sbr.rel (0) target = $region13
    $region12: #{tpu_custom_call.1} parent=1 // pred_region
      _
    $region13: #{tpu_custom_call.1} parent=1 // pred_fallthru
      _
    // Predicated region
    $region14: #{tpu_custom_call.1} parent=1 // pred_check
      _
    $region15: #{tpu_custom_call.1} parent=1 // pred_check_branch
      %40 = sbr.rel (0) target = $region17
    $region16: #{tpu_custom_call.1} parent=1 // pred_region
      %s42 = ssub.s32 1024, 1024
      %43 = vsyncadd [#allocation6], %s42
      %s44 = sshll.u32 [#allocation7], 4
      %s45 = int_to_ptr.vmem [resolvable:$true] %s44
      %50 = dma.hbm_to_vmem [thread:$0]  %s3, 1024, %s45, [#allocation6], 64, 64, 4
    $region17: #{tpu_custom_call.1} parent=1 // pred_fallthru
      _
    // Predicated region
    $region18: #{tpu_custom_call.1} parent=1 // pred_check
      _
    $region19: #{tpu_custom_call.1} parent=1 // pred_check_branch
      %52 = sbr.rel (0) target = $region21
    $region20: #{tpu_custom_call.1} parent=1 // pred_region
      %s54 = ssub.s32 1024, 1024
      %55 = vsyncadd [#allocation9], %s54
      %s56 = sshll.u32 [#allocation8], 4
      %s57 = int_to_ptr.vmem [resolvable:$true] %s56
      %62 = dma.hbm_to_vmem [thread:$0]  %s4, 1024, %s57, [#allocation9], 64, 64, 4
    $region21: #{tpu_custom_call.1} parent=1 // pred_fallthru
      _
    // Predicated region
    $region22: #{tpu_custom_call.1} parent=1 // pred_check
      _
    $region23: #{tpu_custom_call.1} parent=1 // pred_check_branch
      %64 = sbr.rel (0) target = $region25
    $region24: #{tpu_custom_call.1} parent=1 // pred_region
      _
    $region25: #{tpu_custom_call.1} parent=1 // pred_fallthru
      _
    // Predicated region
    $region26: #{tpu_custom_call.1} parent=1 // pred_check
      _
    $region27: #{tpu_custom_call.1} parent=1 // pred_check_branch
      %66 = sbr.rel (0) target = $region29
    $region28: #{tpu_custom_call.1} parent=1 // pred_region
      %s68 = ssub.s32 1024, 1024
      %69 = vsyncadd [#allocation9], %s68
      %s70 = sshll.u32 [#allocation10], 4
      %s71 = int_to_ptr.vmem [resolvable:$true] %s70
      %76 = dma.hbm_to_vmem [thread:$0]  %s6, 1024, %s71, [#allocation9], 64, 64, 4
    $region29: #{tpu_custom_call.1} parent=1 // pred_fallthru
      _
    // Predicated region
    $region30: #{tpu_custom_call.1} parent=1 // pred_check
      _
    $region31: #{tpu_custom_call.1} parent=1 // pred_check_branch
      %78 = sbr.rel (0) target = $region33
    $region32: #{tpu_custom_call.1} parent=1 // pred_region
      _
    $region33: #{tpu_custom_call.1} parent=1 // pred_fallthru
      _
    // Predicated region
    $region34: #{tpu_custom_call.1} parent=1 // pred_check
      _
    $region35: #{tpu_custom_call.1} parent=1 // pred_check_branch
      %80 = sbr.rel (0) target = $region37
    $region36: #{tpu_custom_call.1} parent=1 // pred_region
      %81 = dma.done [#allocation3], 64
    $region37: #{tpu_custom_call.1} parent=1 // pred_fallthru
      _
    // Predicated region
    $region38: #{tpu_custom_call.1} parent=1 // pred_check
      _
    $region39: #{tpu_custom_call.1} parent=1 // pred_check_branch
      %83 = sbr.rel (0) target = $region41
    $region40: #{tpu_custom_call.1} parent=1 // pred_region
      %84 = dma.done [#allocation6], 64
    $region41: #{tpu_custom_call.1} parent=1 // pred_fallthru
      _
    // Predicated region
    $region42: #{tpu_custom_call.1} parent=1 // pred_check
      _
    $region43: #{tpu_custom_call.1} parent=1 // pred_check_branch
      %86 = sbr.rel (0) target = $region45
    $region44: #{tpu_custom_call.1} parent=1 // pred_region
      %87 = dma.done [#allocation6], 1024
    $region45: #{tpu_custom_call.1} parent=1 // pred_fallthru
      _
    // Predicated region
    $region46: #{tpu_custom_call.1} parent=1 // pred_check
      _
    $region47: #{tpu_custom_call.1} parent=1 // pred_check_branch
      %89 = sbr.rel (0) target = $region49
    $region48: #{tpu_custom_call.1} parent=1 // pred_region
      %90 = dma.done [#allocation9], 1024
    $region49: #{tpu_custom_call.1} parent=1 // pred_fallthru
      _
    // Predicated region
    $region50: #{tpu_custom_call.1} parent=1 // pred_check
      _
    $region51: #{tpu_custom_call.1} parent=1 // pred_check_branch
      %92 = sbr.rel (0) target = $region53
    $region52: #{tpu_custom_call.1} parent=1 // pred_region
      %93 = dma.done [#allocation9], 1024
    $region53: #{tpu_custom_call.1} parent=1 // pred_fallthru
      _
    %v95 = vld [vmem:[#allocation5] sm:$0xf]
    %v96 = vld [vmem:[%s2] sm:$0xf]
    %v97 = vmul.bf16 %v95, %v96
    %v98 = vld [vmem:[#allocation7] sm:$0xf]
    %v99 = vld [vmem:[#allocation7 + $0x4] sm:$0xf]
    %v100 = vld [vmem:[#allocation7 + $0x8] sm:$0xf]
    %v101 = vld [vmem:[#allocation7 + $0xc] sm:$0xf]
    %v102 = vld [vmem:[#allocation7 + $0x10] sm:$0xf]
    %v103 = vld [vmem:[#allocation7 + $0x14] sm:$0xf]
    %v104 = vld [vmem:[#allocation7 + $0x18] sm:$0xf]
    %v105 = vld [vmem:[#allocation7 + $0x1c] sm:$0xf]
    %v106 = vld [vmem:[#allocation7 + $0x20] sm:$0xf]
    %v107 = vld [vmem:[#allocation7 + $0x24] sm:$0xf]
    %v108 = vld [vmem:[#allocation7 + $0x28] sm:$0xf]
    %v109 = vld [vmem:[#allocation7 + $0x2c] sm:$0xf]
    %v110 = vld [vmem:[#allocation7 + $0x30] sm:$0xf]
    %v111 = vld [vmem:[#allocation7 + $0x34] sm:$0xf]
    %v112 = vld [vmem:[#allocation7 + $0x38] sm:$0xf]
    %v113 = vld [vmem:[#allocation7 + $0x3c] sm:$0xf]
    %v114 = vld [vmem:[#allocation2] sm:$0xf]
    %v115 = vld [vmem:[#allocation8] sm:$0xf]
    %v116 = vld [vmem:[#allocation8 + $0x4] sm:$0xf]
    %v117 = vld [vmem:[#allocation8 + $0x8] sm:$0xf]
    %v118 = vld [vmem:[#allocation8 + $0xc] sm:$0xf]
    %v119 = vld [vmem:[#allocation8 + $0x10] sm:$0xf]
    %v120 = vld [vmem:[#allocation8 + $0x14] sm:$0xf]
    %v121 = vld [vmem:[#allocation8 + $0x18] sm:$0xf]
    %v122 = vld [vmem:[#allocation8 + $0x1c] sm:$0xf]
    %v123 = vld [vmem:[#allocation8 + $0x20] sm:$0xf]
    %v124 = vld [vmem:[#allocation8 + $0x24] sm:$0xf]
    %v125 = vld [vmem:[#allocation8 + $0x28] sm:$0xf]
    %v126 = vld [vmem:[#allocation8 + $0x2c] sm:$0xf]
    %v127 = vld [vmem:[#allocation8 + $0x30] sm:$0xf]
    %v128 = vld [vmem:[#allocation8 + $0x34] sm:$0xf]
    %v129 = vld [vmem:[#allocation8 + $0x38] sm:$0xf]
    %v130 = vld [vmem:[#allocation8 + $0x3c] sm:$0xf]
    %v147 = vunpack.c.l.b16 %v115
    %v148 = vunpack.c.l.b16 %v116
    %v149 = vunpack.c.l.b16 %v117
    %v150 = vunpack.c.l.b16 %v118
    %v151 = vunpack.c.l.b16 %v119
    %v152 = vunpack.c.l.b16 %v120
    %v153 = vunpack.c.l.b16 %v121
    %v154 = vunpack.c.l.b16 %v122
    %v155 = vunpack.c.l.b16 %v123
    %v156 = vunpack.c.l.b16 %v124
    %v157 = vunpack.c.l.b16 %v125
    %v158 = vunpack.c.l.b16 %v126
    %v159 = vunpack.c.l.b16 %v127
    %v160 = vunpack.c.l.b16 %v128
    %v161 = vunpack.c.l.b16 %v129
    %v162 = vunpack.c.l.b16 %v130
    %v163 = vpack.c.b16 %v148, %v147
    %v164 = vpack.c.b16 %v150, %v149
    %v165 = vpack.c.b16 %v152, %v151
    %v166 = vpack.c.b16 %v154, %v153
    %v167 = vpack.c.b16 %v156, %v155
    %v168 = vpack.c.b16 %v158, %v157
    %v169 = vpack.c.b16 %v160, %v159
    %v170 = vpack.c.b16 %v162, %v161
    %179 = vmatprep.subr.bf16.mxu0 0
    %180 = vmatpush1.bf16.msra.mxu0 %v163
    %181 = vmatprep.subr.bf16.mxu0 0
    %182 = vmatpush1.bf16.msra.mxu0 %v164
    %183 = vmatprep.subr.bf16.mxu0 0
    %184 = vmatpush1.bf16.msra.mxu0 %v165
    %185 = vmatprep.subr.bf16.mxu0 0
    %186 = vmatpush1.bf16.msra.mxu0 %v166
    %187 = vmatprep.subr.bf16.mxu0 0
    %188 = vmatpush1.bf16.msra.mxu0 %v167
    %189 = vmatprep.subr.bf16.mxu0 0
    %190 = vmatpush1.bf16.msra.mxu0 %v168
    %191 = vmatprep.subr.bf16.mxu0 0
    %192 = vmatpush1.bf16.msra.mxu0 %v169
    %193 = vmatprep.subr.bf16.mxu0 0
    %194 = vmatpush1.bf16.msra.mxu0 %v170
    %195 = vmatprep.subr.bf16.mxu0 0
    %196 = vmatpush1.bf16.msra.mxu0 0
    %197 = vmatprep.subr.bf16.mxu0 0
    %198 = vmatpush1.bf16.msra.mxu0 0
    %199 = vmatprep.subr.bf16.mxu0 0
    %200 = vmatpush1.bf16.msra.mxu0 0
    %201 = vmatprep.subr.bf16.mxu0 0
    %202 = vmatpush1.bf16.msra.mxu0 0
    %203 = vmatprep.subr.bf16.mxu0 0
    %204 = vmatpush1.bf16.msra.mxu0 0
    %205 = vmatprep.subr.bf16.mxu0 0
    %206 = vmatpush1.bf16.msra.mxu0 0
    %207 = vmatprep.subr.bf16.mxu0 0
    %208 = vmatpush1.bf16.msra.mxu0 0
    %209 = vmatprep.subr.bf16.mxu0 0
    %210 = vmatpush1.bf16.msra.mxu0 0
    %211 = vmatprep.mubr.bf16.mxu0 0
    %212 = vmatmul.mubr.bf16.gmra.mrb[0].mxu0 %v114
    %v213 = vpop.f32.mrb[0].mxu0
    %v214 = vadd.f32 0.0, %v213
    %v215 = vpop.f32.mrb[0].mxu0
    %v216 = vpop.f32.mrb[0].mxu0
    %v217 = vpop.f32.mrb[0].mxu0
    %218 = vdwg.mxu0
    %v235 = vunpack.c.l.b16 %v98
    %v236 = vunpack.c.l.b16 %v99
    %v237 = vunpack.c.l.b16 %v100
    %v238 = vunpack.c.l.b16 %v101
    %v239 = vunpack.c.l.b16 %v102
    %v240 = vunpack.c.l.b16 %v103
    %v241 = vunpack.c.l.b16 %v104
    %v242 = vunpack.c.l.b16 %v105
    %v243 = vunpack.c.l.b16 %v106
    %v244 = vunpack.c.l.b16 %v107
    %v245 = vunpack.c.l.b16 %v108
    %v246 = vunpack.c.l.b16 %v109
    %v247 = vunpack.c.l.b16 %v110
    %v248 = vunpack.c.l.b16 %v111
    %v249 = vunpack.c.l.b16 %v112
    %v250 = vunpack.c.l.b16 %v113
    %v251 = vpack.c.b16 %v236, %v235
    %v252 = vpack.c.b16 %v238, %v237
    %v253 = vpack.c.b16 %v240, %v239
    %v254 = vpack.c.b16 %v242, %v241
    %v255 = vpack.c.b16 %v244, %v243
    %v256 = vpack.c.b16 %v246, %v245
    %v257 = vpack.c.b16 %v248, %v247
    %v258 = vpack.c.b16 %v250, %v249
    %267 = vmatprep.subr.bf16.mxu0 0
    %268 = vmatpush1.bf16.msra.mxu0 %v251
    %269 = vmatprep.subr.bf16.mxu0 0
    %270 = vmatpush1.bf16.msra.mxu0 %v252
    %271 = vmatprep.subr.bf16.mxu0 0
    %272 = vmatpush1.bf16.msra.mxu0 %v253
    %273 = vmatprep.subr.bf16.mxu0 0
    %274 = vmatpush1.bf16.msra.mxu0 %v254
    %275 = vmatprep.subr.bf16.mxu0 0
    %276 = vmatpush1.bf16.msra.mxu0 %v255
    %277 = vmatprep.subr.bf16.mxu0 0
    %278 = vmatpush1.bf16.msra.mxu0 %v256
    %279 = vmatprep.subr.bf16.mxu0 0
    %280 = vmatpush1.bf16.msra.mxu0 %v257
    %281 = vmatprep.subr.bf16.mxu0 0
    %282 = vmatpush1.bf16.msra.mxu0 %v258
    %283 = vmatprep.subr.bf16.mxu0 0
    %284 = vmatpush1.bf16.msra.mxu0 0
    %285 = vmatprep.subr.bf16.mxu0 0
    %286 = vmatpush1.bf16.msra.mxu0 0
    %287 = vmatprep.subr.bf16.mxu0 0
    %288 = vmatpush1.bf16.msra.mxu0 0
    %289 = vmatprep.subr.bf16.mxu0 0
    %290 = vmatpush1.bf16.msra.mxu0 0
    %291 = vmatprep.subr.bf16.mxu0 0
    %292 = vmatpush1.bf16.msra.mxu0 0
    %293 = vmatprep.subr.bf16.mxu0 0
    %294 = vmatpush1.bf16.msra.mxu0 0
    %295 = vmatprep.subr.bf16.mxu0 0
    %296 = vmatpush1.bf16.msra.mxu0 0
    %297 = vmatprep.subr.bf16.mxu0 0
    %298 = vmatpush1.bf16.msra.mxu0 0
    %299 = vmatprep.mubr.bf16.mxu0 0
    %300 = vmatmul.mubr.bf16.gmra.mrb[0].mxu0 %v97
    %v301 = vpop.f32.mrb[0].mxu0
    %v302 = vadd.f32 %v214, %v301
    %v303 = vpop.f32.mrb[0].mxu0
    %v304 = vpop.f32.mrb[0].mxu0
    %v305 = vpop.f32.mrb[0].mxu0
    %306 = vdwg.mxu0
    %v307 = vld [vmem:[%s5] sm:$0x1]
    %v309 = vlaneseq
    %v310 = vshrl.u32 %v309, 7
    %v311 = vsub.s32 0, %v310
    %v312 = vrot.slane %v307, %v311
    %v314 = vadd.f32 %v302, %v312
    %v315 = vpack.c.bf16 %v314, %v314
    %v316 = vld [vmem:[#allocation10] sm:$0xf]
    %v317 = vld [vmem:[#allocation10 + $0x4] sm:$0xf]
    %v318 = vld [vmem:[#allocation10 + $0x8] sm:$0xf]
    %v319 = vld [vmem:[#allocation10 + $0xc] sm:$0xf]
    %v320 = vld [vmem:[#allocation10 + $0x10] sm:$0xf]
    %v321 = vld [vmem:[#allocation10 + $0x14] sm:$0xf]
    %v322 = vld [vmem:[#allocation10 + $0x18] sm:$0xf]
    %v323 = vld [vmem:[#allocation10 + $0x1c] sm:$0xf]
    %v324 = vld [vmem:[#allocation10 + $0x20] sm:$0xf]
    %v325 = vld [vmem:[#allocation10 + $0x24] sm:$0xf]
    %v326 = vld [vmem:[#allocation10 + $0x28] sm:$0xf]
    %v327 = vld [vmem:[#allocation10 + $0x2c] sm:$0xf]
    %v328 = vld [vmem:[#allocation10 + $0x30] sm:$0xf]
    %v329 = vld [vmem:[#allocation10 + $0x34] sm:$0xf]
    %v330 = vld [vmem:[#allocation10 + $0x38] sm:$0xf]
    %v331 = vld [vmem:[#allocation10 + $0x3c] sm:$0xf]
    %v332 = vld [vmem:[%s7] sm:$0x1]
    %v334 = vlaneseq
    %v335 = vshrl.u32 %v334, 7
    %v336 = vsub.s32 0, %v335
    %v337 = vrot.slane %v332, %v336
    %v355 = vunpack.c.l.b16 %v316
    %v356 = vunpack.c.l.b16 %v317
    %v357 = vunpack.c.l.b16 %v318
    %v358 = vunpack.c.l.b16 %v319
    %v359 = vunpack.c.l.b16 %v320
    %v360 = vunpack.c.l.b16 %v321
    %v361 = vunpack.c.l.b16 %v322
    %v362 = vunpack.c.l.b16 %v323
    %v363 = vunpack.c.l.b16 %v324
    %v364 = vunpack.c.l.b16 %v325
    %v365 = vunpack.c.l.b16 %v326
    %v366 = vunpack.c.l.b16 %v327
    %v367 = vunpack.c.l.b16 %v328
    %v368 = vunpack.c.l.b16 %v329
    %v369 = vunpack.c.l.b16 %v330
    %v370 = vunpack.c.l.b16 %v331
    %v371 = vpack.c.b16 %v356, %v355
    %v372 = vpack.c.b16 %v358, %v357
    %v373 = vpack.c.b16 %v360, %v359
    %v374 = vpack.c.b16 %v362, %v361
    %v375 = vpack.c.b16 %v364, %v363
    %v376 = vpack.c.b16 %v366, %v365
    %v377 = vpack.c.b16 %v368, %v367
    %v378 = vpack.c.b16 %v370, %v369
    %387 = vmatprep.subr.bf16.mxu0 0
    %388 = vmatpush1.bf16.msra.mxu0 %v371
    %389 = vmatprep.subr.bf16.mxu0 0
    %390 = vmatpush1.bf16.msra.mxu0 %v372
    %391 = vmatprep.subr.bf16.mxu0 0
    %392 = vmatpush1.bf16.msra.mxu0 %v373
    %393 = vmatprep.subr.bf16.mxu0 0
    %394 = vmatpush1.bf16.msra.mxu0 %v374
    %395 = vmatprep.subr.bf16.mxu0 0
    %396 = vmatpush1.bf16.msra.mxu0 %v375
    %397 = vmatprep.subr.bf16.mxu0 0
    %398 = vmatpush1.bf16.msra.mxu0 %v376
    %399 = vmatprep.subr.bf16.mxu0 0
    %400 = vmatpush1.bf16.msra.mxu0 %v377
    %401 = vmatprep.subr.bf16.mxu0 0
    %402 = vmatpush1.bf16.msra.mxu0 %v378
    %403 = vmatprep.subr.bf16.mxu0 0
    %404 = vmatpush1.bf16.msra.mxu0 0
    %405 = vmatprep.subr.bf16.mxu0 0
    %406 = vmatpush1.bf16.msra.mxu0 0
    %407 = vmatprep.subr.bf16.mxu0 0
    %408 = vmatpush1.bf16.msra.mxu0 0
    %409 = vmatprep.subr.bf16.mxu0 0
    %410 = vmatpush1.bf16.msra.mxu0 0
    %411 = vmatprep.subr.bf16.mxu0 0
    %412 = vmatpush1.bf16.msra.mxu0 0
    %413 = vmatprep.subr.bf16.mxu0 0
    %414 = vmatpush1.bf16.msra.mxu0 0
    %415 = vmatprep.subr.bf16.mxu0 0
    %416 = vmatpush1.bf16.msra.mxu0 0
    %417 = vmatprep.subr.bf16.mxu0 0
    %418 = vmatpush1.bf16.msra.mxu0 0
    %419 = vmatprep.mubr.bf16.mxu0 0
    %420 = vmatmul.mubr.bf16.gmra.mrb[0].mxu0 %v315
    %v421 = vpop.f32.mrb[0].mxu0
    %v422 = vadd.f32 %v337, %v421
    %v423 = vpop.f32.mrb[0].mxu0
    %v424 = vpop.f32.mrb[0].mxu0
    %v425 = vpop.f32.mrb[0].mxu0
    %426 = vdwg.mxu0
    %427 = vst [vmem:[#allocation11] sm:$0xff] %v422
    // Predicated region
    $region54: #{tpu_custom_call.1} parent=1 // pred_check
      _
    $region55: #{tpu_custom_call.1} parent=1 // pred_check_branch
      %429 = sbr.rel (0) target = $region57
    $region56: #{tpu_custom_call.1} parent=1 // pred_region
      %s431 = ssub.s32 128, 128
      %432 = vsyncadd [#allocation4], %s431
      %s434 = sshll.u32 [#allocation11], 4
      %s435 = int_to_ptr.vmem [resolvable:$true] %s434
      %437 = dma.vmem_to_hbm [thread:$0]  %s435, 128, %s8, [#allocation4]
    $region57: #{tpu_custom_call.1} parent=1 // pred_fallthru
      _
    // Predicated region
    $region58: #{tpu_custom_call.1} parent=1 // pred_check
      _
    $region59: #{tpu_custom_call.1} parent=1 // pred_check_branch
      %439 = sbr.rel (0) target = $region61
    $region60: #{tpu_custom_call.1} parent=1 // pred_region
      %440 = dma.done [#allocation4], 128
    $region61: #{tpu_custom_call.1} parent=1 // pred_fallthru
      _
    %441 = vsyncpa [#allocation3], 1
    %442 = vsyncpa [#allocation6], 1
    %443 = vsyncpa [#allocation9], 1
    %444 = vsyncpa [#allocation4], 1

</llo_original>
